<compile_context>
chip_gen: v7x
topology: tpu7x:2x2x1
jax: 0.10.0
libtpu: 0.0.40
codegen_flags: <defaults>
</compile_context>

<pallas_src>
import jax
import jax.numpy as jnp
from jax.experimental import pallas as pl
from jax.experimental.pallas import tpu as pltpu


def _codebook_kernel(params_ref, out_ref):
    # Whole codebook is a single lane-dense VMEM tile: plain copy.
    out_ref[...] = params_ref[...]


@jax.jit
def codebook_forward(params):
    """Pallas equivalent of CodeBook.forward(): returns the codebook tensor.

    params: jnp.ndarray of shape (1, 20, 1, 8), float32.
    """
    shape = params.shape
    # Lane-dense (1, N*C*H*W) slab; under jit this reshape is a bitcast.
    flat = params.reshape(1, params.size)

    out_flat = pl.pallas_call(
        _codebook_kernel,
        out_shape=jax.ShapeDtypeStruct(flat.shape, flat.dtype),
        # Grid-less call, full-array blocks resident in VMEM.
        in_specs=[pl.BlockSpec(memory_space=pltpu.MemorySpace.VMEM)],
        out_specs=pl.BlockSpec(memory_space=pltpu.MemorySpace.VMEM),
    )(flat)

    return out_flat.reshape(shape)


if __name__ == "__main__":
    # Deterministic parameter init (stand-in for torch.randn in __init__).
    key = jax.random.PRNGKey(0)
    params = jax.random.normal(key, (1, 20, 1, 8), dtype=jnp.float32)

    out = codebook_forward(params)
    jax.block_until_ready(out)

    # Sanity check: forward() must return the parameter tensor unchanged.
    assert out.shape == (1, 20, 1, 8)
    assert out.dtype == params.dtype
    assert jnp.allclose(out, params)

    print("KERNEL_OK")
</pallas_src>

<mosaic_0001>
module attributes {stable_mosaic.version = 11 : i64} {
  func.func @_codebook_kernel(%arg0: memref<1x160xf32, #tpu.memory_space<vmem>>, %arg1: memref<1x160xf32, #tpu.memory_space<vmem>>) attributes {dimension_semantics = [], scalar_prefetch = 0 : i64, scratch_operands = 0 : i64, tpu.core_type = #tpu.core_type<tc>} {
    %c0 = arith.constant 0 : index
    %c0_0 = arith.constant 0 : index
    %0 = vector.load %arg0[%c0, %c0_0] : memref<1x160xf32, #tpu.memory_space<vmem>>, vector<1x160xf32>
    %c0_1 = arith.constant 0 : index
    %c0_2 = arith.constant 0 : index
    %1 = vector.load %arg1[%c0_1, %c0_2] : memref<1x160xf32, #tpu.memory_space<vmem>>, vector<1x160xf32>
    tpu.vector_store %arg1[%c0_1, %c0_2], %0 {strides = array<i32>} : memref<1x160xf32, #tpu.memory_space<vmem>>, vector<1x160xf32>,
    return
  }
}

</mosaic_0001>

<llo_original>
// kernel: codebook_forward.1
$region0: #{codebook_forward.1}
  #allocation0 [shape = 'u32[]', space=smem, size = 0x4, offset = 0x4, fixed_abs, tag = 'smem constant byte address 0x4 - core index']
  #allocation1 [shape = 'u32[144,128]{1,0:T(1,128)}', space=vmem, size = 0x12000, scoped, tag = 'internal scratch']
  %s0 = inlined_call_operand.vmem [shape: f32[1,160], index: 0, kind: input, shape index: {}]
  %s1 = inlined_call_operand.vmem [shape: f32[1,160], index: 1, kind: output, shape index: {}]
  %s2 = sld [smem:[#allocation0]]
  $region14: #{codebook_forward.1} parent=0
    _
  %s4 = ssub.s32 1, %s2
  %s5 = scalar_select 0, %s4, %s2
  // Predicated region
  $region2: #{codebook_forward.1} parent=0 // pred_check
    _
  $region3: #{codebook_forward.1} parent=0 // pred_check_branch
    %7 = sbr.rel (0) target = $region5
  $region4: #{codebook_forward.1} parent=0 // pred_region
    _
  $region5: #{codebook_forward.1} parent=0 // pred_fallthru
    _
  %v8 = vld [vmem:[%s0] sm:$0x3]
  %v9 = vlaneseq
  %vm10 = vcmp.ge.s32.totalorder %v9, 0
  %vm11 = vcmp.lt.s32.totalorder %v9, 160
  %vm12 = vmand %vm10, %vm11
  %13 = vst.msk [vmem:[%s1] sm:$0x3] %vm12, %v8
  // Predicated region
  $region6: #{codebook_forward.1} parent=0 // pred_check
    _
  $region7: #{codebook_forward.1} parent=0 // pred_check_branch
    %15 = sbr.rel (0) target = $region9
  $region8: #{codebook_forward.1} parent=0 // pred_region
    _
  $region9: #{codebook_forward.1} parent=0 // pred_fallthru
    _
  // Predicated region
  $region10: #{codebook_forward.1} parent=0 // pred_check
    _
  $region11: #{codebook_forward.1} parent=0 // pred_check_branch
    %17 = sbr.rel (0) target = $region13
  $region12: #{codebook_forward.1} parent=0 // pred_region
    _
  $region13: #{codebook_forward.1} parent=0 // pred_fallthru
    _

</llo_original>
